<compile_context>
chip_gen: v5e
topology: v5e:2x2
jax: 0.10.0
libtpu: 0.0.40
codegen_flags: <defaults>
</compile_context>

<pallas_src>
import jax
import jax.numpy as jnp
from jax.experimental import pallas as pl
from jax.experimental.pallas import tpu as pltpu


def _round_up(x, m):
    return (x + m - 1) // m * m


def _round_down(x, m):
    return (x // m) * m


def _vmem_capacity_bytes():
    try:
        return int(pltpu.get_tpu_info().vmem_capacity_bytes)
    except Exception:
        return 64 * 1024 * 1024  # conservative (v7x per-TC VMEM)


def _pick_tv(V, E, TB, w_itemsize, vmem_cap):
    # Size the vocab tile from a VMEM budget: double-buffered W^T (E,TV), out (TB,TV) f32,
    # bias (1,TV) f32, plus the double-buffered (TB,E) f32 row tiles.  Leave half of VMEM as
    # headroom for compiler scratch / pipelining slack.
    budget = vmem_cap // 2
    fixed = 2 * TB * E * 4
    per_tv = 2 * (E * w_itemsize + TB * 4 + 4)
    tv = (budget - fixed) // per_tv
    tv = _round_down(int(tv), 128)
    tv = max(128, min(tv, 8192))
    tv = min(tv, _round_up(V, 128))
    return tv


def skipgram_kernel(x_ref, wt_ref, b_ref, out_ref):
    # x_ref: (TB, E) gathered embedding rows (f32)
    # wt_ref: (E, TV) pre-transposed Linear weight tile (f32 or bf16)
    # b_ref:  (1, TV) bias tile (f32)
    # out_ref: (TB, TV) f32
    x = x_ref[...].astype(jnp.float32)

    # nn.Embedding(max_norm=1): rows with L2 norm > 1 are scaled back to unit norm.
    n2 = jnp.sum(x * x, axis=-1, keepdims=True)          # XLU reduce
    scale = jnp.where(n2 > 1.0, jax.lax.rsqrt(n2), 1.0)  # single EUP op
    x = (x * scale).astype(wt_ref.dtype)

    # nn.Linear: y = x @ W^T + b, fed as (TB,E) x (E,TV) -> f32 accumulation on the MXU.
    y = jnp.dot(x, wt_ref[...], preferred_element_type=jnp.float32)
    out_ref[...] = y + b_ref[...].astype(jnp.float32)


def skipgram_forward(indices, emb_table, weight_t, bias):
    """indices: (B,) int32; emb_table: (V, E) f32; weight_t: (E, V) [f32 or bf16, converted once
    at parameter load]; bias: (V,) f32  ->  (B, V) f32."""
    B = indices.shape[0]
    V, E = emb_table.shape
    assert weight_t.shape == (E, V)

    # Batch tiling: sublane-dense (multiple of 8), up to 128 rows per tile.
    if B <= 128:
        TB = _round_up(B, 8)
    else:
        TB = 128
    B_pad = _round_up(B, TB)
    num_b = B_pad // TB

    # Vocab tiling: lane-dense (multiple of 128), sized from the VMEM budget per generation.
    vmem_cap = _vmem_capacity_bytes()
    TV = _pick_tv(V, E, TB, jnp.dtype(weight_t.dtype).itemsize, vmem_cap)
    if num_b == 1:
        # Guarantee >= 2 vocab tiles so the parallel grid can shard across 2 TensorCores.
        half = _round_down(_round_up(V, 128) // 2, 128)
        if half >= 128:
            TV = min(TV, half)
    num_v = pl.cdiv(V, TV)

    # One bulk gather of all looked-up rows (single XLA gather, no per-row DMAs).
    idx_pad = jnp.pad(indices, (0, B_pad - B))            # pad rows gather row 0; sliced off below
    rows = jnp.take(emb_table, idx_pad, axis=0)           # (B_pad, E) f32

    # Only the tiny 1-D bias is padded (the big weight stays untouched; ragged last tile).
    V_bias = num_v * TV
    b2d = jnp.pad(bias, (0, V_bias - V)).reshape(1, V_bias)

    grid = (num_v, num_b)   # vocab outer, batch inner -> weight tile DMA'd once per vocab tile

    out = pl.pallas_call(
        skipgram_kernel,
        out_shape=jax.ShapeDtypeStruct((B_pad, V), jnp.float32),
        grid=grid,
        in_specs=[
            pl.BlockSpec((TB, E), lambda vj, bi: (bi, 0)),   # gathered rows
            pl.BlockSpec((E, TV), lambda vj, bi: (0, vj)),   # W^T tile (constant along inner axis)
            pl.BlockSpec((1, TV), lambda vj, bi: (0, vj)),   # bias tile
        ],
        out_specs=pl.BlockSpec((TB, TV), lambda vj, bi: (bi, vj)),
        compiler_params=pltpu.CompilerParams(
            dimension_semantics=("parallel", "parallel"),    # both axes independent -> megacore
            vmem_limit_bytes=min(int(vmem_cap * 3 // 4), 110 * 1024 * 1024),
        ),
    )(rows, weight_t, b2d)

    return out[:B, :]


def skipgram_reference(indices, emb_table, weight, bias):
    rows = emb_table[indices]                              # (B, E)
    n = jnp.linalg.norm(rows, axis=-1, keepdims=True)
    scale = jnp.where(n > 1.0, 1.0 / (n + 1e-7), 1.0)
    x = rows * scale
    return x @ weight.T + bias[None, :]


if __name__ == "__main__":
    VOCAB, EMBED, BATCH = 384, 128, 8

    key = jax.random.PRNGKey(0)
    k_emb, k_scale, k_w, k_b, k_idx = jax.random.split(key, 5)

    # Row norms spread around 1 so both renorm branches are exercised.
    row_scale = jax.random.uniform(k_scale, (VOCAB, 1), minval=0.02, maxval=0.2)
    emb_table = jax.random.normal(k_emb, (VOCAB, EMBED), dtype=jnp.float32) * row_scale
    weight = jax.random.normal(k_w, (VOCAB, EMBED), dtype=jnp.float32) * 0.05   # PyTorch (out,in)
    bias = jax.random.normal(k_b, (VOCAB,), dtype=jnp.float32) * 0.01
    indices = jax.random.randint(k_idx, (BATCH,), 0, VOCAB, dtype=jnp.int32)

    # One-time parameter-load conversions (NOT per-call work): transposed f32 and bf16 weights.
    weight_t_f32 = jnp.asarray(weight.T)                       # (E, V)
    weight_t_bf16 = jnp.asarray(weight.T, dtype=jnp.bfloat16)  # (E, V) bf16, converted once

    ref = skipgram_reference(indices, emb_table, weight, bias)

    # f32 path: tight check against the PyTorch module's forward semantics.
    out_f32 = jax.block_until_ready(skipgram_forward(indices, emb_table, weight_t_f32, bias))
    assert out_f32.shape == (BATCH, VOCAB)
    assert jnp.allclose(out_f32, ref, atol=1e-4, rtol=1e-4), "f32 kernel mismatch vs. reference"

    # bf16 weight-streaming path (production default: halves weight HBM traffic, f32 accumulation).
    out_bf16 = jax.block_until_ready(skipgram_forward(indices, emb_table, weight_t_bf16, bias))
    assert out_bf16.shape == (BATCH, VOCAB)
    assert jnp.allclose(out_bf16, ref, atol=2e-2, rtol=2e-2), "bf16 kernel mismatch vs. reference"

    print("KERNEL_OK")
</pallas_src>

<mosaic_0001>
module attributes {stable_mosaic.version = 11 : i64} {
  func.func @skipgram_kernel(%arg0: i32, %arg1: i32, %arg2: memref<8x128xf32, #tpu.memory_space<vmem>>, %arg3: memref<128x128xf32, #tpu.memory_space<vmem>>, %arg4: memref<1x128xf32, #tpu.memory_space<vmem>>, %arg5: memref<8x128xf32, #tpu.memory_space<vmem>>) attributes {dimension_semantics = [#tpu.dimension_semantics<parallel>, #tpu.dimension_semantics<parallel>], iteration_bounds = array<i64: 3, 1>, scalar_prefetch = 0 : i64, scratch_operands = 0 : i64, tpu.core_type = #tpu.core_type<tc>, window_params = [{transform_indices = @transform_0, window_bounds = array<i64: 8, 128>}, {transform_indices = @transform_1, window_bounds = array<i64: 128, 128>}, {transform_indices = @transform_2, window_bounds = array<i64: 1, 128>}, {transform_indices = @transform_3, window_bounds = array<i64: 8, 128>}]} {
    %c0 = arith.constant 0 : index
    %c0_0 = arith.constant 0 : index
    %0 = vector.load %arg2[%c0, %c0_0] : memref<8x128xf32, #tpu.memory_space<vmem>>, vector<8x128xf32>
    %1 = arith.mulf %0, %0 : vector<8x128xf32>
    %cst = arith.constant dense<0.000000e+00> : vector<8xf32>
    %2 = vector.multi_reduction <add>, %1, %cst [1] : vector<8x128xf32> to vector<8xf32>
    %3 = vector.shape_cast %2 : vector<8xf32> to vector<8x1xf32>
    %cst_1 = arith.constant 1.000000e+00 : f32
    %4 = vector.broadcast %cst_1 : f32 to vector<8x1xf32>
    %5 = arith.cmpf ogt, %3, %4 : vector<8x1xf32>
    %6 = math.rsqrt %3 : vector<8x1xf32>
    %cst_2 = arith.constant 1.000000e+00 : f32
    %7 = vector.broadcast %cst_2 : f32 to vector<8x1xf32>
    %8 = arith.select %5, %6, %7 : vector<8x1xi1>, vector<8x1xf32>
    %9 = vector.broadcast %8 : vector<8x1xf32> to vector<8x128xf32>
    %10 = arith.mulf %0, %9 : vector<8x128xf32>
    %c0_3 = arith.constant 0 : index
    %c0_4 = arith.constant 0 : index
    %11 = vector.load %arg3[%c0_3, %c0_4] : memref<128x128xf32, #tpu.memory_space<vmem>>, vector<128x128xf32>
    %cst_5 = arith.constant dense<0.000000e+00> : vector<8x128xf32>
    %12 = tpu.matmul %10, %11, %cst_5 {dimension_numbers = #tpu.dot_dimension_numbers<[1], [0], [0], [1], [0, 0, 1, 1], [], []>} : vector<8x128xf32>, vector<128x128xf32>, vector<8x128xf32> -> vector<8x128xf32>
    %c0_6 = arith.constant 0 : index
    %c0_7 = arith.constant 0 : index
    %13 = vector.load %arg4[%c0_6, %c0_7] : memref<1x128xf32, #tpu.memory_space<vmem>>, vector<1x128xf32>
    %14 = vector.broadcast %13 : vector<1x128xf32> to vector<8x128xf32>
    %15 = arith.addf %12, %14 : vector<8x128xf32>
    %c0_8 = arith.constant 0 : index
    %c0_9 = arith.constant 0 : index
    %16 = vector.load %arg5[%c0_8, %c0_9] : memref<8x128xf32, #tpu.memory_space<vmem>>, vector<8x128xf32>
    tpu.vector_store %arg5[%c0_8, %c0_9], %15 {strides = array<i32>} : memref<8x128xf32, #tpu.memory_space<vmem>>, vector<8x128xf32>,
    return
  }
  func.func @transform_0(%arg0: i32, %arg1: i32) -> (i32, i32) {
    %c0_i32 = arith.constant 0 : i32
    %c0_i32_0 = arith.constant 0 : i32
    return %arg1, %c0_i32 : i32, i32
  }
  func.func @transform_1(%arg0: i32, %arg1: i32) -> (i32, i32) {
    %c0_i32 = arith.constant 0 : i32
    %c0_i32_0 = arith.constant 0 : i32
    return %c0_i32, %arg0 : i32, i32
  }
  func.func @transform_2(%arg0: i32, %arg1: i32) -> (i32, i32) {
    %c0_i32 = arith.constant 0 : i32
    %c0_i32_0 = arith.constant 0 : i32
    return %c0_i32, %arg0 : i32, i32
  }
  func.func @transform_3(%arg0: i32, %arg1: i32) -> (i32, i32) {
    %c0_i32 = arith.constant 0 : i32
    return %arg1, %arg0 : i32, i32
  }
}

</mosaic_0001>

<llo_original>
// kernel: tpu_custom_call.1
$region0: #{tpu_custom_call.1}
  #allocation0 [shape = 'u32[]', space=smem, size = 0x4, offset = 0x4, fixed_abs, tag = 'smem constant byte address 0x4 - core index']
  #allocation1 [shape = 'u32[72,128]{1,0:T(1,128)}', space=vmem, size = 0x9000, scoped, tag = 'internal scratch']
  %s0 = inlined_call_operand.hbm [shape: f32[8,128], index: 0, kind: input, shape index: {}]
  %s1 = inlined_call_operand.hbm [shape: f32[128,384], index: 1, kind: input, shape index: {}]
  %s2 = inlined_call_operand.hbm [shape: f32[1,384], index: 2, kind: input, shape index: {}]
  %s3 = inlined_call_operand.hbm [shape: f32[8,384], index: 3, kind: output, shape index: {}]
  %s4 = sld [smem:[#allocation0]]
  $region57: #{tpu_custom_call.1} parent=0
    _
  %s6 = ssub.s32 1, %s4
  %s7 = scalar_select 0, %s6, %s4
  $region1: #{tpu_custom_call.1} parent=0
    #allocation2 [shape = 'u8[4096]{0}', space=vmem, size = 0x1000, scoped, tag = 'input window, operand 0, single buffered']
    #allocation3 [shape = 's32[2]{0}', space=sflag, size = 0x8, scoped, tag = 'scoped memory for tpu_custom_call.1']
    #allocation4 [shape = 's32[2]{0}', space=sflag, size = 0x8, scoped, tag = 'scoped memory for tpu_custom_call.1']
    #allocation5 [shape = 'u8[131072]{0}', space=vmem, size = 0x20000, scoped, tag = 'input window, operand 1']
    #allocation6 [shape = 's32[2]{0}', space=sflag, size = 0x8, scoped, tag = 'scoped memory for tpu_custom_call.1']
    #allocation7 [shape = 'u8[1024]{0}', space=vmem, size = 0x400, scoped, tag = 'input window, operand 2']
    #allocation8 [shape = 'u8[8192]{0}', space=vmem, size = 0x2000, scoped, tag = 'output window, operand 0']
    %8 = vsyncpa [#allocation3], 0
    %9 = vsyncpa [#allocation6], 0
    %s10 = scalar_lea.sflag [#allocation6], 1
    %11 = vsyncpa %s10, 0
    %12 = vsyncpa [#allocation4], 0
    %s13 = scalar_lea.sflag [#allocation4], 1
    %14 = vsyncpa %s13, 0
    loop: start=0, step=1, limit=5
    $region2: #{tpu_custom_call.1} parent=1 // loop_pre_header
      _
    $region3: #{tpu_custom_call.1} parent=1 // loop_header
      %s16 = sphi 0, %s20
      %p17 = scmp.ge.s32.totalorder %s16, 5
      %s23 = sphi 0, %s35
      %s24 = sphi 0, %s31
      %s25 = sphi 0, %s23
      %s26 = sphi 0, %s24
      %s27 = sphi 0, %s25
      %s28 = sphi 0, %s26
      %s38 = sphi 0, %s40
      %s41 = sphi 0, %s38
      %s42 = sphi 0, %s41
      %s58 = sphi 0, %s42
      %s64 = sphi 0, %s66
      %s67 = sphi 0, %s64
      %s68 = sphi 0, %s67
      %s84 = sphi 0, %s68
      %s90 = sphi 0, %s92
      %s93 = sphi 0, %s90
      %s94 = sphi 0, %s93
      %s110 = sphi 0, %s94
      %s118 = sphi 0, %s120
      %s121 = sphi 0, %s118
      %s122 = sphi 0, %s121
      %s138 = sphi 0, %s122
    $region4: #{tpu_custom_call.1} parent=1 // loop_header_branch
      %19 = sbr.rel (%p17) target = $region8
    $region5: #{tpu_custom_call.1} parent=1 // loop_body
      %s21 = ssub.s32 %s16, 1
      %s22 = ssub.s32 %s16, 2
      %s29 = sadd.s32 1, %s24
      %p30 = scmp.ge.s32.totalorder %s29, 1
      %s31 = scalar_select %p30, 0, %s29
      %s32 = sadd.s32 1, %s23
      %s33 = scalar_select %p30, %s32, %s23
      %p34 = scmp.ge.s32.totalorder %s33, 3
      %s35 = scalar_select %p34, 0, %s33
      %s36 = ssub.s32 %s24, %s31
      %p37 = scmp.eq.s32.totalorder %s36, 0
      %s39 = sadd.s32 %s38, 1
      %s40 = scalar_select %p37, %s38, %s39
      %p43 = pneg %p37
      %p44 = scmp.eq.s32.totalorder %s16, 2
      %p45 = por %p43, %p44
      %p46 = scmp.ne.s32.totalorder %s38, %s41
      %p47 = scmp.eq.s32.totalorder %s16, 0
      %p48 = por %p46, %p47
      %p49 = scmp.ne.s32.totalorder %s38, %s41
      %p50 = scmp.eq.s32.totalorder %s21, 2
      %p51 = por %p49, %p50
      %p52 = scmp.ne.s32.totalorder %s41, %s42
      %p53 = scmp.eq.s32.totalorder %s21, 0
      %p54 = por %p52, %p53
      %p55 = scmp.ne.s32.totalorder %s41, %s42
      %p56 = scmp.eq.s32.totalorder %s22, 2
      %p57 = por %p55, %p56
      %p59 = scmp.ne.s32.totalorder %s42, %s58
      %p60 = scmp.eq.s32.totalorder %s22, 0
      %p61 = por %p59, %p60
      %s62 = ssub.s32 %s23, %s35
      %p63 = scmp.eq.s32.totalorder %s62, 0
      %s65 = sadd.s32 %s64, 1
      %s66 = scalar_select %p63, %s64, %s65
      %p69 = pneg %p63
      %p70 = scmp.eq.s32.totalorder %s16, 2
      %p71 = por %p69, %p70
      %p72 = scmp.ne.s32.totalorder %s64, %s67
      %p73 = scmp.eq.s32.totalorder %s16, 0
      %p74 = por %p72, %p73
      %p75 = scmp.ne.s32.totalorder %s64, %s67
      %p76 = scmp.eq.s32.totalorder %s21, 2
      %p77 = por %p75, %p76
      %p78 = scmp.ne.s32.totalorder %s67, %s68
      %p79 = scmp.eq.s32.totalorder %s21, 0
      %p80 = por %p78, %p79
      %p81 = scmp.ne.s32.totalorder %s67, %s68
      %p82 = scmp.eq.s32.totalorder %s22, 2
      %p83 = por %p81, %p82
      %p85 = scmp.ne.s32.totalorder %s68, %s84
      %p86 = scmp.eq.s32.totalorder %s22, 0
      %p87 = por %p85, %p86
      %s88 = ssub.s32 %s23, %s35
      %p89 = scmp.eq.s32.totalorder %s88, 0
      %s91 = sadd.s32 %s90, 1
      %s92 = scalar_select %p89, %s90, %s91
      %p95 = pneg %p89
      %p96 = scmp.eq.s32.totalorder %s16, 2
      %p97 = por %p95, %p96
      %p98 = scmp.ne.s32.totalorder %s90, %s93
      %p99 = scmp.eq.s32.totalorder %s16, 0
      %p100 = por %p98, %p99
      %p101 = scmp.ne.s32.totalorder %s90, %s93
      %p102 = scmp.eq.s32.totalorder %s21, 2
      %p103 = por %p101, %p102
      %p104 = scmp.ne.s32.totalorder %s93, %s94
      %p105 = scmp.eq.s32.totalorder %s21, 0
      %p106 = por %p104, %p105
      %p107 = scmp.ne.s32.totalorder %s93, %s94
      %p108 = scmp.eq.s32.totalorder %s22, 2
      %p109 = por %p107, %p108
      %p111 = scmp.ne.s32.totalorder %s94, %s110
      %p112 = scmp.eq.s32.totalorder %s22, 0
      %p113 = por %p111, %p112
      %s114 = ssub.s32 %s24, %s31
      %s115 = ssub.s32 %s23, %s35
      %s116 = sor.u32 %s114, %s115
      %p117 = scmp.eq.s32.totalorder %s116, 0
      %s119 = sadd.s32 %s118, 1
      %s120 = scalar_select %p117, %s118, %s119
      %p123 = pneg %p117
      %p124 = scmp.eq.s32.totalorder %s16, 2
      %p125 = por %p123, %p124
      %p126 = scmp.ne.s32.totalorder %s118, %s121
      %p127 = scmp.eq.s32.totalorder %s16, 0
      %p128 = por %p126, %p127
      %p129 = scmp.ne.s32.totalorder %s118, %s121
      %p130 = scmp.eq.s32.totalorder %s21, 2
      %p131 = por %p129, %p130
      %p132 = scmp.ne.s32.totalorder %s121, %s122
      %p133 = scmp.eq.s32.totalorder %s21, 0
      %p134 = por %p132, %p133
      %p135 = scmp.ne.s32.totalorder %s121, %s122
      %p136 = scmp.eq.s32.totalorder %s22, 2
      %p137 = por %p135, %p136
      %p139 = scmp.ne.s32.totalorder %s122, %s138
      %p140 = scmp.eq.s32.totalorder %s22, 0
      %p141 = por %p139, %p140
      %p142 = scmp.le.s32.totalorder 1, %s16
      %p143 = scmp.lt.s32.totalorder %s16, 4
      %p144 = pnand %p142, %p143
      %p145 = pneg %p144
      // Predicated region
      $region9: #{tpu_custom_call.1} parent=5 // pred_check
        _
      $region10: #{tpu_custom_call.1} parent=5 // pred_check_branch
        %147 = sbr.rel (%p144) target = $region12
      $region11: #{tpu_custom_call.1} parent=5 // pred_region
        %s148 = ssub.s32 %s16, 1
        // Predicated region
        $region13: #{tpu_custom_call.1} parent=11 // pred_check
          %p149 = pneg %p54
        $region14: #{tpu_custom_call.1} parent=11 // pred_check_branch
          %151 = sbr.rel (%p149) target = $region16
        $region15: #{tpu_custom_call.1} parent=11 // pred_region
          %153 = vsyncadd [#allocation3], 0
          %s154 = smul.addr %s26, 8
          %s155 = scalar_lea.hbm %s0, %s154
          %s157 = sshll.u32 %s155, 4
          %s158 = int_to_ptr.hbm [resolvable:$true] %s157
          %s159 = sshll.u32 [#allocation2], 4
          %s160 = int_to_ptr.vmem [resolvable:$true] %s159
          %162 = dma.hbm_to_vmem [thread:$0]  %s158, 128, %s160, [#allocation3]
        $region16: #{tpu_custom_call.1} parent=11 // pred_fallthru
          _
      $region12: #{tpu_custom_call.1} parent=5 // pred_fallthru
        _
      %p163 = scmp.lt.s32.totalorder %s16, 3
      // Predicated region
      $region17: #{tpu_custom_call.1} parent=5 // pred_check
        %p164 = pneg %p163
      $region18: #{tpu_custom_call.1} parent=5 // pred_check_branch
        %166 = sbr.rel (%p164) target = $region20
      $region19: #{tpu_custom_call.1} parent=5 // pred_region
        // Predicated region
        $region21: #{tpu_custom_call.1} parent=19 // pred_check
          %p167 = pneg %p74
        $region22: #{tpu_custom_call.1} parent=19 // pred_check_branch
          %169 = sbr.rel (%p167) target = $region24
        $region23: #{tpu_custom_call.1} parent=19 // pred_region
          %s170 = sand.u32 %s16, 1
          %s171 = scalar_lea.sflag [#allocation6], %s170
          %s172 = sand.u32 %s64, 1
          %s173 = smul.addr %s172, 128
          %s174 = scalar_lea.vmem [#allocation5], %s173
          %176 = vsyncadd %s171, 0
          %s177 = smul.addr %s23, 8
          %s178 = scalar_lea.hbm %s1, %s177
          %s179 = sshll.u32 %s178, 4
          %s180 = int_to_ptr.hbm [resolvable:$true] %s179
          %s181 = sshll.u32 %s174, 4
          %s182 = int_to_ptr.vmem [resolvable:$true] %s181
          %187 = dma.hbm_to_vmem [thread:$0]  %s180, 2048, %s182, %s171, 384, 128, 8
        $region24: #{tpu_custom_call.1} parent=19 // pred_fallthru
          _
        // Predicated region
        $region25: #{tpu_custom_call.1} parent=19 // pred_check
          %p188 = pneg %p100
        $region26: #{tpu_custom_call.1} parent=19 // pred_check_branch
          %190 = sbr.rel (%p188) target = $region28
        $region27: #{tpu_custom_call.1} parent=19 // pred_region
          %s191 = sand.u32 %s16, 1
          %s192 = scalar_lea.sflag [#allocation6], %s191
          %s193 = sand.u32 %s90, 1
          %s194 = scalar_lea.vmem [#allocation7], %s193
          %196 = vsyncadd %s192, 0
          %s197 = scalar_lea.hbm %s2, %s23
          %s199 = sshll.u32 %s197, 4
          %s200 = int_to_ptr.hbm [resolvable:$true] %s199
          %s201 = sshll.u32 %s194, 4
          %s202 = int_to_ptr.vmem [resolvable:$true] %s201
          %204 = dma.hbm_to_vmem [thread:$0]  %s200, 16, %s202, %s192
        $region28: #{tpu_custom_call.1} parent=19 // pred_fallthru
          _
      $region20: #{tpu_custom_call.1} parent=5 // pred_fallthru
        _
      %p205 = scmp.le.s32.totalorder 1, %s16
      %p206 = scmp.lt.s32.totalorder %s16, 4
      %p207 = pnand %p205, %p206
      %p208 = pneg %p207
      // Predicated region
      $region29: #{tpu_custom_call.1} parent=5 // pred_check
        _
      $region30: #{tpu_custom_call.1} parent=5 // pred_check_branch
        %210 = sbr.rel (%p207) target = $region32
      $region31: #{tpu_custom_call.1} parent=5 // pred_region
        %s211 = ssub.s32 %s16, 1
        // Predicated region
        $region33: #{tpu_custom_call.1} parent=31 // pred_check
          %p212 = pneg %p54
        $region34: #{tpu_custom_call.1} parent=31 // pred_check_branch
          %214 = sbr.rel (%p212) target = $region36
        $region35: #{tpu_custom_call.1} parent=31 // pred_region
          %216 = dma.done [#allocation3], 128
        $region36: #{tpu_custom_call.1} parent=31 // pred_fallthru
          _
        %s217 = sand.u32 %s21, 1
        %s218 = scalar_lea.sflag [#allocation6], %s217
        %s219 = sand.u32 %s67, 1
        %s220 = smul.addr %s219, 128
        %s221 = scalar_lea.vmem [#allocation5], %s220
        // Predicated region
        $region37: #{tpu_custom_call.1} parent=31 // pred_check
          %p222 = pneg %p80
        $region38: #{tpu_custom_call.1} parent=31 // pred_check_branch
          %224 = sbr.rel (%p222) target = $region40
        $region39: #{tpu_custom_call.1} parent=31 // pred_region
          %226 = dma.done %s218, 2048
        $region40: #{tpu_custom_call.1} parent=31 // pred_fallthru
          _
        %s227 = sand.u32 %s21, 1
        %s228 = scalar_lea.sflag [#allocation6], %s227
        %s229 = sand.u32 %s93, 1
        %s230 = scalar_lea.vmem [#allocation7], %s229
        // Predicated region
        $region41: #{tpu_custom_call.1} parent=31 // pred_check
          %p231 = pneg %p106
        $region42: #{tpu_custom_call.1} parent=31 // pred_check_branch
          %233 = sbr.rel (%p231) target = $region44
        $region43: #{tpu_custom_call.1} parent=31 // pred_region
          %235 = dma.done %s228, 16
        $region44: #{tpu_custom_call.1} parent=31 // pred_fallthru
          _
        %p236 = pneg %p54
        %p237 = pneg %p51
        %s238 = sand.u32 %s21, 1
        %s239 = scalar_lea.sflag [#allocation6], %s238
        %s240 = sand.u32 %s67, 1
        %s241 = smul.addr %s240, 128
        %s242 = scalar_lea.vmem [#allocation5], %s241
        %p243 = pneg %p80
        %p244 = pneg %p77
        %s245 = sand.u32 %s21, 1
        %s246 = scalar_lea.sflag [#allocation6], %s245
        %s247 = sand.u32 %s93, 1
        %s248 = scalar_lea.vmem [#allocation7], %s247
        %p249 = pneg %p106
        %p250 = pneg %p103
        %p251 = pneg %p134
        %p252 = pneg %p131
        %s253 = sand.u32 %s121, 1
        %s254 = scalar_lea.sflag [#allocation4], %s253
        %s255 = sand.u32 %s121, 1
        %s256 = smul.addr %s255, 8
        %s257 = scalar_lea.vmem [#allocation8], %s256
        %v258 = vld [vmem:[#allocation2] sm:$0xff]
        %v259 = vmul.f32 %v258, %v258
        %260 = vadd.xlane.f32.xlu0 %v259
        %v261 = vpop.xlane.xlu0 %260
        %vm262 = vcmp.gt.f32.partialorder %v261, 1.0
        %v263 = vrsqrt.pop %v261
        %v264 = vmul.f32 %v263, %v261
        %v265 = vmul.f32 %v264, %v263
        %v266 = vmul.f32 0.5, %v265
        %v267 = vsub.f32 1.5, %v266
        %v268 = vmul.f32 %v263, %v267
        %vm269 = vweird.f32 %v261
        %vm270 = vweird.f32 %v263
        %vm271 = vmor %vm269, %vm270
        %v272 = vsel %vm271, %v263, %v268
        %v273 = vsel %vm262, %v272, 1.0
        %v274 = vmul.f32 %v258, %v273
        %v275 = vld [vmem:[%s221] sm:$0xff]
        %v276 = vld [vmem:[%s221 + $0x8] sm:$0xff]
        %v277 = vld [vmem:[%s221 + $0x10] sm:$0xff]
        %v278 = vld [vmem:[%s221 + $0x18] sm:$0xff]
        %v279 = vld [vmem:[%s221 + $0x20] sm:$0xff]
        %v280 = vld [vmem:[%s221 + $0x28] sm:$0xff]
        %v281 = vld [vmem:[%s221 + $0x30] sm:$0xff]
        %v282 = vld [vmem:[%s221 + $0x38] sm:$0xff]
        %v283 = vld [vmem:[%s221 + $0x40] sm:$0xff]
        %v284 = vld [vmem:[%s221 + $0x48] sm:$0xff]
        %v285 = vld [vmem:[%s221 + $0x50] sm:$0xff]
        %v286 = vld [vmem:[%s221 + $0x58] sm:$0xff]
        %v287 = vld [vmem:[%s221 + $0x60] sm:$0xff]
        %v288 = vld [vmem:[%s221 + $0x68] sm:$0xff]
        %v289 = vld [vmem:[%s221 + $0x70] sm:$0xff]
        %v290 = vld [vmem:[%s221 + $0x78] sm:$0xff]
        %v291 = vld [vmem:[%s230] sm:$0x1]
        %v293 = vperm.slane %v291, 0
        %295 = vmatpush.msra.mxu0 %v290
        %296 = vmatpush.msra.mxu0 %v289
        %297 = vmatpush.msra.mxu0 %v288
        %298 = vmatpush.msra.mxu0 %v287
        %299 = vmatpush.msra.mxu0 %v286
        %300 = vmatpush.msra.mxu0 %v285
        %301 = vmatpush.msra.mxu0 %v284
        %302 = vmatpush.msra.mxu0 %v283
        %303 = vmatpush.msra.mxu0 %v282
        %304 = vmatpush.msra.mxu0 %v281
        %305 = vmatpush.msra.mxu0 %v280
        %306 = vmatpush.msra.mxu0 %v279
        %307 = vmatpush.msra.mxu0 %v278
        %308 = vmatpush.msra.mxu0 %v277
        %309 = vmatpush.msra.mxu0 %v276
        %310 = vmatpush.msra.mxu0 %v275
        %311 = vmatmul.f32.gmra.mxu0 %v274
        %v312 = vpop.f32.mrf.mxu0
        %v313 = vadd.f32 %v293, %v312
        %314 = vdwg.mxu0
        %315 = vst [vmem:[%s257] sm:$0xff] %v313
        %s316 = sand.u32 %s121, 1
        %s317 = scalar_lea.sflag [#allocation4], %s316
        %s318 = sand.u32 %s121, 1
        %s319 = smul.addr %s318, 8
        %s320 = scalar_lea.vmem [#allocation8], %s319
        // Predicated region
        $region45: #{tpu_custom_call.1} parent=31 // pred_check
          %p321 = pneg %p131
        $region46: #{tpu_custom_call.1} parent=31 // pred_check_branch
          %323 = sbr.rel (%p321) target = $region48
        $region47: #{tpu_custom_call.1} parent=31 // pred_region
          %325 = vsyncadd %s317, 0
          %s326 = smul.addr %s26, 3
          %s327 = sadd.s32 %s25, %s326
          %s328 = smul.addr %s327, 8
          %s329 = scalar_lea.hbm %s3, %s328
          %s331 = sshll.u32 %s320, 4
          %s332 = int_to_ptr.vmem [resolvable:$true] %s331
          %s333 = sshll.u32 %s329, 4
          %s334 = int_to_ptr.hbm [resolvable:$true] %s333
          %336 = dma.vmem_to_hbm [thread:$0]  %s332, 128, %s334, %s317
        $region48: #{tpu_custom_call.1} parent=31 // pred_fallthru
          _
      $region32: #{tpu_custom_call.1} parent=5 // pred_fallthru
        _
      %p337 = scmp.le.s32.totalorder 2, %s16
      // Predicated region
      $region49: #{tpu_custom_call.1} parent=5 // pred_check
        %p338 = pneg %p337
      $region50: #{tpu_custom_call.1} parent=5 // pred_check_branch
        %340 = sbr.rel (%p338) target = $region52
      $region51: #{tpu_custom_call.1} parent=5 // pred_region
        %s341 = ssub.s32 %s16, 2
        // Predicated region
        $region53: #{tpu_custom_call.1} parent=51 // pred_check
          %p342 = pneg %p137
        $region54: #{tpu_custom_call.1} parent=51 // pred_check_branch
          %344 = sbr.rel (%p342) target = $region56
        $region55: #{tpu_custom_call.1} parent=51 // pred_region
          %s345 = sand.u32 %s122, 1
          %s346 = scalar_lea.sflag [#allocation4], %s345
          %s347 = sand.u32 %s122, 1
          %s348 = smul.addr %s347, 8
          %s349 = scalar_lea.vmem [#allocation8], %s348
          %351 = dma.done %s346, 128
        $region56: #{tpu_custom_call.1} parent=51 // pred_fallthru
          _
      $region52: #{tpu_custom_call.1} parent=5 // pred_fallthru
        _
    $region6: #{tpu_custom_call.1} parent=1 // loop_footer
      %s20 = sadd.s32 1, %s16
    $region7: #{tpu_custom_call.1} parent=1 // loop_footer_branch
      %15 = sbr.rel target = $region3
    $region8: #{tpu_custom_call.1} parent=1 // loop_exit
      _
    %352 = vsyncpa [#allocation3], 1
    %s353 = scalar_lea.sflag [#allocation3], 1
    %354 = vsyncpa %s353, 1
    %355 = vsyncpa [#allocation6], 1
    %s356 = scalar_lea.sflag [#allocation6], 1
    %357 = vsyncpa %s356, 1
    %358 = vsyncpa [#allocation4], 1
    %s359 = scalar_lea.sflag [#allocation4], 1
    %360 = vsyncpa %s359, 1

</llo_original>
